<compile_context>
chip_gen: v5e
topology: v5e:2x2
jax: 0.10.0
libtpu: 0.0.40
codegen_flags: <defaults>
</compile_context>

<pallas_src>
import jax
import jax.numpy as jnp
from jax import lax
from jax.experimental import pallas as pl
from jax.experimental.pallas import tpu as pltpu

_LANES = 128
_SUBLANES = 8


def _cdiv(a, b):
    return -(-a // b)


def _focal_loss_kernel(n_ref, x_ref, gt_ref, m_ref,
                       tot_ref, npos_ref,
                       tot_acc, npos_acc):
    c = pl.program_id(0)          # chunk (parallel axis)
    t = pl.program_id(1)          # row-tile within chunk (reduction axis)
    tiles_per_chunk = pl.num_programs(1)

    @pl.when(t == 0)
    def _():
        tot_acc[...] = jnp.zeros_like(tot_acc)
        npos_acc[...] = jnp.zeros_like(npos_acc)

    x = x_ref[...].astype(jnp.float32)     # logits
    gt = gt_ref[...].astype(jnp.float32)
    msk = m_ref[...].astype(jnp.float32)

    # Numerically stable sigmoid / log-sigmoid sharing a single exp (EUP):
    #   log(sigmoid(x))     = min(x, 0)  - log1p(exp(-|x|))
    #   log(1 - sigmoid(x)) = min(-x, 0) - log1p(exp(-|x|))
    e = jnp.exp(-jnp.abs(x))
    log1pe = jnp.log1p(e)
    log_p = jnp.minimum(x, 0.0) - log1pe
    log_1mp = jnp.minimum(-x, 0.0) - log1pe
    inv = 1.0 / (1.0 + e)
    p_hi = inv            # sigmoid(|x|)
    p_lo = e * inv        # sigmoid(-|x|)
    pred = jnp.where(x >= 0.0, p_hi, p_lo)
    one_m_pred = jnp.where(x >= 0.0, p_lo, p_hi)

    pos_ind = jnp.where(gt == 1.0, msk, 0.0)
    neg_ind = jnp.where(gt < 1.0, msk, 0.0)
    neg_w = (1.0 - gt) ** 4

    # Fused pos+neg per-element contribution (single reduction instead of two).
    per_elem = (log_p * one_m_pred * one_m_pred * pos_ind
                + log_1mp * pred * pred * neg_w * neg_ind)

    # Mask the ragged tail: host padding, Pallas partial-final-block padding,
    # and clamped over-shoot tiles of the last chunk all have flat_idx >= n.
    tile_rows = x.shape[0]
    global_tile = c * tiles_per_chunk + t
    row0 = global_tile * tile_rows
    row_ids = lax.broadcasted_iota(jnp.int32, x.shape, 0) + row0
    lane_ids = lax.broadcasted_iota(jnp.int32, x.shape, 1)
    flat_idx = row_ids * _LANES + lane_ids
    valid = flat_idx < n_ref[0]

    per_elem = jnp.where(valid, per_elem, 0.0)
    pos_ind = jnp.where(valid, pos_ind, 0.0)

    tot_acc[...] += jnp.sum(per_elem)
    npos_acc[...] += jnp.sum(pos_ind)

    @pl.when(t == tiles_per_chunk - 1)
    def _():
        tot_ref[...] = tot_acc[...]
        npos_ref[...] = npos_acc[...]


def focal_loss(output, target, mask, *, tile_rows=2048, num_chunks=2):
    """Pallas equivalent of FocalLoss().forward(output, target, mask) -> scalar.

    `output` holds pre-sigmoid logits (the module applies torch.sigmoid itself).
    """
    assert output.shape == target.shape == mask.shape
    n = int(output.size)

    flat_o = output.reshape(-1)
    flat_t = target.reshape(-1)
    flat_m = mask.reshape(-1)

    # Only pad when numel is not a multiple of 8*128 (padded elements are
    # masked out in-kernel anyway; typical CenterNet heads need no pad/copy).
    block_elems = _SUBLANES * _LANES
    n_pad = _cdiv(n, block_elems) * block_elems
    pad = n_pad - n
    if pad:
        flat_o = jnp.pad(flat_o, (0, pad))
        flat_t = jnp.pad(flat_t, (0, pad))
        flat_m = jnp.pad(flat_m, (0, pad))

    rows = n_pad // _LANES
    o2 = flat_o.reshape(rows, _LANES)
    t2 = flat_t.reshape(rows, _LANES)
    m2 = flat_m.reshape(rows, _LANES)

    # Tile sizing: (2048,128) f32 x 3 inputs x 2 pipeline buffers = 6 MiB,
    # safe under the default scoped VMEM on v5e/v6e/v7x.
    tile_rows = min(tile_rows, rows)            # rows is a multiple of 8
    num_tiles = _cdiv(rows, tile_rows)
    num_chunks = max(1, min(num_chunks, num_tiles))
    tpc = _cdiv(num_tiles, num_chunks)          # tiles per chunk

    def in_map(c, t, n_sref):
        # Clamp overshoot tiles of the last chunk to a valid block; their
        # contribution is zeroed in-kernel via the flat-index mask.
        return (jnp.minimum(c * tpc + t, num_tiles - 1), 0)

    def out_map(c, t, n_sref):
        return (c, 0, 0)

    in_spec = pl.BlockSpec((tile_rows, _LANES), in_map)
    out_spec = pl.BlockSpec((None, 1, 1), out_map)   # kernel sees a (1,1) ref

    grid_spec = pltpu.PrefetchScalarGridSpec(
        num_scalar_prefetch=1,
        grid=(num_chunks, tpc),
        in_specs=[in_spec, in_spec, in_spec],
        out_specs=[out_spec, out_spec],
        scratch_shapes=[pltpu.VMEM((1, 1), jnp.float32),
                        pltpu.VMEM((1, 1), jnp.float32)],
    )

    bytes_accessed = int(o2.size * o2.dtype.itemsize
                         + t2.size * t2.dtype.itemsize
                         + m2.size * m2.dtype.itemsize
                         + 2 * num_chunks * 4)
    cost = pl.CostEstimate(flops=25 * n, transcendentals=2 * n,
                           bytes_accessed=bytes_accessed)

    n_arr = jnp.array([n], dtype=jnp.int32)

    tot, npos = pl.pallas_call(
        _focal_loss_kernel,
        grid_spec=grid_spec,
        out_shape=[jax.ShapeDtypeStruct((num_chunks, 1, 1), jnp.float32),
                   jax.ShapeDtypeStruct((num_chunks, 1, 1), jnp.float32)],
        compiler_params=pltpu.CompilerParams(
            dimension_semantics=("parallel", "arbitrary")),
        cost_estimate=cost,
    )(n_arr, o2, t2, m2)

    total = jnp.sum(tot)
    num_pos = jnp.sum(npos)
    # When num_pos == 0 the positive contribution is identically 0, so
    # -total == -neg_loss, matching the PyTorch branch.
    return jnp.where(num_pos == 0.0, -total, -total / num_pos)


def _focal_loss_ref(output, target, mask):
    """Pure-JAX reference matching the PyTorch semantics."""
    pred = jax.nn.sigmoid(output)
    pos_inds = (target == 1.0).astype(jnp.float32) * mask
    neg_inds = (target < 1.0).astype(jnp.float32) * mask
    neg_weights = (1.0 - target) ** 4
    pos_loss = jnp.log(pred) * (1.0 - pred) ** 2 * pos_inds
    neg_loss = jnp.log(1.0 - pred) * pred ** 2 * neg_weights * neg_inds
    num_pos = pos_inds.sum()
    pos_s = pos_loss.sum()
    neg_s = neg_loss.sum()
    return jnp.where(num_pos == 0.0, -neg_s, -(pos_s + neg_s) / num_pos)


if __name__ == "__main__":
    key = jax.random.PRNGKey(0)
    k1, k2, k3, k4 = jax.random.split(key, 4)

    B, C, H, W = 2, 4, 16, 16  # NCHW, matching the PyTorch module's inputs

    # logits (pre-sigmoid)
    output = jax.random.normal(k1, (B, C, H, W), dtype=jnp.float32)

    # target heatmap in [0, 1) with a few exact 1.0 "peaks"
    target = jax.random.uniform(k2, (B, C, H, W), dtype=jnp.float32) * 0.9
    peaks = jax.random.bernoulli(k3, p=0.02, shape=(B, C, H, W))
    target = jnp.where(peaks, 1.0, target)

    # binary mask
    mask = jax.random.bernoulli(k4, p=0.8, shape=(B, C, H, W)).astype(jnp.float32)

    loss = focal_loss(output, target, mask)
    loss = jax.block_until_ready(loss)

    ref = _focal_loss_ref(output, target, mask)
    assert jnp.allclose(loss, ref, rtol=1e-4, atol=1e-5), (loss, ref)

    print("KERNEL_OK")
</pallas_src>

<mosaic_0001>
module attributes {stable_mosaic.version = 11 : i64} {
  func.func @_focal_loss_kernel(%arg0: i32, %arg1: i32, %arg2: memref<1xi32, #tpu.memory_space<smem>>, %arg3: memref<16x128xf32, #tpu.memory_space<vmem>>, %arg4: memref<16x128xf32, #tpu.memory_space<vmem>>, %arg5: memref<16x128xf32, #tpu.memory_space<vmem>>, %arg6: memref<1x1x1xf32, #tpu.memory_space<vmem>>, %arg7: memref<1x1x1xf32, #tpu.memory_space<vmem>>, %arg8: memref<1x1xf32, #tpu.memory_space<vmem>>, %arg9: memref<1x1xf32, #tpu.memory_space<vmem>>) attributes {dimension_semantics = [#tpu.dimension_semantics<parallel>, #tpu.dimension_semantics<arbitrary>], iteration_bounds = array<i64: 1, 1>, scalar_prefetch = 1 : i64, scratch_operands = 2 : i64, tpu.core_type = #tpu.core_type<tc>, window_params = [{transform_indices = @transform_0, window_bounds = array<i64: 16, 128>}, {transform_indices = @transform_1, window_bounds = array<i64: 16, 128>}, {transform_indices = @transform_2, window_bounds = array<i64: 16, 128>}, {transform_indices = @transform_3, window_bounds = array<i64: 1, 1, 1>}, {transform_indices = @transform_4, window_bounds = array<i64: 1, 1, 1>}]} {
    %c0_i32 = arith.constant 0 : i32
    %0 = arith.cmpi eq, %arg1, %c0_i32 : i32
    %1 = arith.extui %0 : i1 to i32
    %c0_i32_0 = arith.constant 0 : i32
    %2 = arith.cmpi ne, %1, %c0_i32_0 : i32
    scf.if %2 {
      %cst_33 = arith.constant 0.000000e+00 : f32
      %86 = vector.broadcast %cst_33 : f32 to vector<1x1xf32>
      %c0_34 = arith.constant 0 : index
      %c0_35 = arith.constant 0 : index
      %87 = vector.load %arg8[%c0_34, %c0_35] : memref<1x1xf32, #tpu.memory_space<vmem>>, vector<1x1xf32>
      tpu.vector_store %arg8[%c0_34, %c0_35], %86 {strides = array<i32>} : memref<1x1xf32, #tpu.memory_space<vmem>>, vector<1x1xf32>,
      %cst_36 = arith.constant 0.000000e+00 : f32
      %88 = vector.broadcast %cst_36 : f32 to vector<1x1xf32>
      %c0_37 = arith.constant 0 : index
      %c0_38 = arith.constant 0 : index
      %89 = vector.load %arg9[%c0_37, %c0_38] : memref<1x1xf32, #tpu.memory_space<vmem>>, vector<1x1xf32>
      tpu.vector_store %arg9[%c0_37, %c0_38], %88 {strides = array<i32>} : memref<1x1xf32, #tpu.memory_space<vmem>>, vector<1x1xf32>,
    } else {
    }
    %c0 = arith.constant 0 : index
    %c0_1 = arith.constant 0 : index
    %3 = vector.load %arg3[%c0, %c0_1] : memref<16x128xf32, #tpu.memory_space<vmem>>, vector<16x128xf32>
    %c0_2 = arith.constant 0 : index
    %c0_3 = arith.constant 0 : index
    %4 = vector.load %arg4[%c0_2, %c0_3] : memref<16x128xf32, #tpu.memory_space<vmem>>, vector<16x128xf32>
    %c0_4 = arith.constant 0 : index
    %c0_5 = arith.constant 0 : index
    %5 = vector.load %arg5[%c0_4, %c0_5] : memref<16x128xf32, #tpu.memory_space<vmem>>, vector<16x128xf32>
    %6 = math.absf %3 : vector<16x128xf32>
    %cst = arith.constant 0.000000e+00 : f32
    %7 = vector.broadcast %cst : f32 to vector<16x128xf32>
    %8 = arith.subf %7, %6 : vector<16x128xf32>
    %9 = math.exp %8 : vector<16x128xf32>
    %10 = math.log1p %9 : vector<16x128xf32>
    %cst_6 = arith.constant 0.000000e+00 : f32
    %11 = vector.broadcast %cst_6 : f32 to vector<16x128xf32>
    %12 = arith.minimumf %3, %11 : vector<16x128xf32>
    %13 = arith.subf %12, %10 : vector<16x128xf32>
    %cst_7 = arith.constant 0.000000e+00 : f32
    %14 = vector.broadcast %cst_7 : f32 to vector<16x128xf32>
    %15 = arith.subf %14, %3 : vector<16x128xf32>
    %cst_8 = arith.constant 0.000000e+00 : f32
    %16 = vector.broadcast %cst_8 : f32 to vector<16x128xf32>
    %17 = arith.minimumf %15, %16 : vector<16x128xf32>
    %18 = arith.subf %17, %10 : vector<16x128xf32>
    %cst_9 = arith.constant 1.000000e+00 : f32
    %19 = vector.broadcast %cst_9 : f32 to vector<16x128xf32>
    %20 = arith.addf %19, %9 : vector<16x128xf32>
    %cst_10 = arith.constant 1.000000e+00 : f32
    %21 = vector.broadcast %cst_10 : f32 to vector<16x128xf32>
    %22 = arith.divf %21, %20 : vector<16x128xf32>
    %23 = arith.mulf %9, %22 : vector<16x128xf32>
    %cst_11 = arith.constant 0.000000e+00 : f32
    %24 = vector.broadcast %cst_11 : f32 to vector<16x128xf32>
    %25 = arith.cmpf oge, %3, %24 : vector<16x128xf32>
    %26 = arith.select %25, %22, %23 : vector<16x128xi1>, vector<16x128xf32>
    %cst_12 = arith.constant 0.000000e+00 : f32
    %27 = vector.broadcast %cst_12 : f32 to vector<16x128xf32>
    %28 = arith.cmpf oge, %3, %27 : vector<16x128xf32>
    %29 = arith.select %28, %23, %22 : vector<16x128xi1>, vector<16x128xf32>
    %cst_13 = arith.constant 1.000000e+00 : f32
    %30 = vector.broadcast %cst_13 : f32 to vector<16x128xf32>
    %31 = arith.cmpf oeq, %4, %30 : vector<16x128xf32>
    %cst_14 = arith.constant 0.000000e+00 : f32
    %32 = vector.broadcast %cst_14 : f32 to vector<16x128xf32>
    %33 = arith.select %31, %5, %32 : vector<16x128xi1>, vector<16x128xf32>
    %cst_15 = arith.constant 1.000000e+00 : f32
    %34 = vector.broadcast %cst_15 : f32 to vector<16x128xf32>
    %35 = arith.cmpf olt, %4, %34 : vector<16x128xf32>
    %cst_16 = arith.constant 0.000000e+00 : f32
    %36 = vector.broadcast %cst_16 : f32 to vector<16x128xf32>
    %37 = arith.select %35, %5, %36 : vector<16x128xi1>, vector<16x128xf32>
    %cst_17 = arith.constant 1.000000e+00 : f32
    %38 = vector.broadcast %cst_17 : f32 to vector<16x128xf32>
    %39 = arith.subf %38, %4 : vector<16x128xf32>
    %40 = arith.mulf %39, %39 : vector<16x128xf32>
    %41 = arith.mulf %40, %40 : vector<16x128xf32>
    %42 = arith.mulf %13, %29 : vector<16x128xf32>
    %43 = arith.mulf %42, %29 : vector<16x128xf32>
    %44 = arith.mulf %43, %33 : vector<16x128xf32>
    %45 = arith.mulf %18, %26 : vector<16x128xf32>
    %46 = arith.mulf %45, %26 : vector<16x128xf32>
    %47 = arith.mulf %46, %41 : vector<16x128xf32>
    %48 = arith.mulf %47, %37 : vector<16x128xf32>
    %49 = arith.addf %44, %48 : vector<16x128xf32>
    %c1_i32 = arith.constant 1 : i32
    %50 = arith.muli %arg0, %c1_i32 : i32
    %51 = arith.addi %50, %arg1 : i32
    %c16_i32 = arith.constant 16 : i32
    %52 = arith.muli %51, %c16_i32 : i32
    %53 = tpu.iota {dimensions = array<i32: 0>} : vector<16x128xi32>
    %54 = vector.broadcast %52 : i32 to vector<16x128xi32>
    %55 = arith.addi %53, %54 : vector<16x128xi32>
    %56 = tpu.iota {dimensions = array<i32: 1>} : vector<16x128xi32>
    %c128_i32 = arith.constant 128 : i32
    %57 = vector.broadcast %c128_i32 : i32 to vector<16x128xi32>
    %58 = arith.muli %55, %57 : vector<16x128xi32>
    %59 = arith.addi %58, %56 : vector<16x128xi32>
    %c0_18 = arith.constant 0 : index
    %60 = memref.load %arg2[%c0_18] : memref<1xi32, #tpu.memory_space<smem>>
    %61 = vector.broadcast %60 : i32 to vector<16x128xi32>
    %62 = arith.cmpi slt, %59, %61 : vector<16x128xi32>
    %cst_19 = arith.constant 0.000000e+00 : f32
    %63 = vector.broadcast %cst_19 : f32 to vector<16x128xf32>
    %64 = arith.select %62, %49, %63 : vector<16x128xi1>, vector<16x128xf32>
    %cst_20 = arith.constant 0.000000e+00 : f32
    %65 = vector.broadcast %cst_20 : f32 to vector<16x128xf32>
    %66 = arith.select %62, %33, %65 : vector<16x128xi1>, vector<16x128xf32>
    %c0_21 = arith.constant 0 : index
    %c0_22 = arith.constant 0 : index
    %67 = vector.load %arg8[%c0_21, %c0_22] : memref<1x1xf32, #tpu.memory_space<vmem>>, vector<1x1xf32>
    %68 = vector.shape_cast %64 : vector<16x128xf32> to vector<1x16x128xf32>
    %cst_23 = arith.constant dense<0.000000e+00> : vector<1xf32>
    %69 = vector.multi_reduction <add>, %68, %cst_23 [1, 2] : vector<1x16x128xf32> to vector<1xf32>
    %70 = vector.shape_cast %69 : vector<1xf32> to vector<1x1x1xf32>
    %71 = vector.extract %70[0, 0, 0] : f32 from vector<1x1x1xf32>
    %72 = vector.broadcast %71 : f32 to vector<1x1xf32>
    %73 = arith.addf %67, %72 : vector<1x1xf32>
    %c0_24 = arith.constant 0 : index
    %c0_25 = arith.constant 0 : index
    %74 = vector.load %arg8[%c0_24, %c0_25] : memref<1x1xf32, #tpu.memory_space<vmem>>, vector<1x1xf32>
    tpu.vector_store %arg8[%c0_24, %c0_25], %73 {strides = array<i32>} : memref<1x1xf32, #tpu.memory_space<vmem>>, vector<1x1xf32>,
    %c0_26 = arith.constant 0 : index
    %c0_27 = arith.constant 0 : index
    %75 = vector.load %arg9[%c0_26, %c0_27] : memref<1x1xf32, #tpu.memory_space<vmem>>, vector<1x1xf32>
    %76 = vector.shape_cast %66 : vector<16x128xf32> to vector<1x16x128xf32>
    %cst_28 = arith.constant dense<0.000000e+00> : vector<1xf32>
    %77 = vector.multi_reduction <add>, %76, %cst_28 [1, 2] : vector<1x16x128xf32> to vector<1xf32>
    %78 = vector.shape_cast %77 : vector<1xf32> to vector<1x1x1xf32>
    %79 = vector.extract %78[0, 0, 0] : f32 from vector<1x1x1xf32>
    %80 = vector.broadcast %79 : f32 to vector<1x1xf32>
    %81 = arith.addf %75, %80 : vector<1x1xf32>
    %c0_29 = arith.constant 0 : index
    %c0_30 = arith.constant 0 : index
    %82 = vector.load %arg9[%c0_29, %c0_30] : memref<1x1xf32, #tpu.memory_space<vmem>>, vector<1x1xf32>
    tpu.vector_store %arg9[%c0_29, %c0_30], %81 {strides = array<i32>} : memref<1x1xf32, #tpu.memory_space<vmem>>, vector<1x1xf32>,
    %c0_i32_31 = arith.constant 0 : i32
    %83 = arith.cmpi eq, %arg1, %c0_i32_31 : i32
    %84 = arith.extui %83 : i1 to i32
    %c0_i32_32 = arith.constant 0 : i32
    %85 = arith.cmpi ne, %84, %c0_i32_32 : i32
    scf.if %85 {
      %c0_33 = arith.constant 0 : index
      %c0_34 = arith.constant 0 : index
      %86 = vector.load %arg8[%c0_33, %c0_34] : memref<1x1xf32, #tpu.memory_space<vmem>>, vector<1x1xf32>
      %c0_35 = arith.constant 0 : index
      %c0_36 = arith.constant 0 : index
      %c0_37 = arith.constant 0 : index
      %87 = vector.load %arg6[%c0_35, %c0_36, %c0_37] : memref<1x1x1xf32, #tpu.memory_space<vmem>>, vector<1x1x1xf32>
      %88 = vector.shape_cast %87 : vector<1x1x1xf32> to vector<1x1xf32>
      %89 = vector.shape_cast %86 : vector<1x1xf32> to vector<1x1x1xf32>
      tpu.vector_store %arg6[%c0_35, %c0_36, %c0_37], %89 {strides = array<i32>} : memref<1x1x1xf32, #tpu.memory_space<vmem>>, vector<1x1x1xf32>,
      %c0_38 = arith.constant 0 : index
      %c0_39 = arith.constant 0 : index
      %90 = vector.load %arg9[%c0_38, %c0_39] : memref<1x1xf32, #tpu.memory_space<vmem>>, vector<1x1xf32>
      %c0_40 = arith.constant 0 : index
      %c0_41 = arith.constant 0 : index
      %c0_42 = arith.constant 0 : index
      %91 = vector.load %arg7[%c0_40, %c0_41, %c0_42] : memref<1x1x1xf32, #tpu.memory_space<vmem>>, vector<1x1x1xf32>
      %92 = vector.shape_cast %91 : vector<1x1x1xf32> to vector<1x1xf32>
      %93 = vector.shape_cast %90 : vector<1x1xf32> to vector<1x1x1xf32>
      tpu.vector_store %arg7[%c0_40, %c0_41, %c0_42], %93 {strides = array<i32>} : memref<1x1x1xf32, #tpu.memory_space<vmem>>, vector<1x1x1xf32>,
    } else {
    }
    return
  }
  func.func @transform_0(%arg0: i32, %arg1: i32, %arg2: memref<1xi32, #tpu.memory_space<smem>>) -> (i32, i32) {
    %c1_i32 = arith.constant 1 : i32
    %0 = arith.muli %arg0, %c1_i32 : i32
    %1 = arith.addi %0, %arg1 : i32
    %c0_i32 = arith.constant 0 : i32
    %2 = arith.minsi %1, %c0_i32 : i32
    %c0_i32_0 = arith.constant 0 : i32
    %c0_i32_1 = arith.constant 0 : i32
    return %2, %c0_i32_0 : i32, i32
  }
  func.func @transform_1(%arg0: i32, %arg1: i32, %arg2: memref<1xi32, #tpu.memory_space<smem>>) -> (i32, i32) {
    %c1_i32 = arith.constant 1 : i32
    %0 = arith.muli %arg0, %c1_i32 : i32
    %1 = arith.addi %0, %arg1 : i32
    %c0_i32 = arith.constant 0 : i32
    %2 = arith.minsi %1, %c0_i32 : i32
    %c0_i32_0 = arith.constant 0 : i32
    %c0_i32_1 = arith.constant 0 : i32
    return %2, %c0_i32_0 : i32, i32
  }
  func.func @transform_2(%arg0: i32, %arg1: i32, %arg2: memref<1xi32, #tpu.memory_space<smem>>) -> (i32, i32) {
    %c1_i32 = arith.constant 1 : i32
    %0 = arith.muli %arg0, %c1_i32 : i32
    %1 = arith.addi %0, %arg1 : i32
    %c0_i32 = arith.constant 0 : i32
    %2 = arith.minsi %1, %c0_i32 : i32
    %c0_i32_0 = arith.constant 0 : i32
    %c0_i32_1 = arith.constant 0 : i32
    return %2, %c0_i32_0 : i32, i32
  }
  func.func @transform_3(%arg0: i32, %arg1: i32, %arg2: memref<1xi32, #tpu.memory_space<smem>>) -> (i32, i32, i32) {
    %c0_i32 = arith.constant 0 : i32
    %c0_i32_0 = arith.constant 0 : i32
    %c0_i32_1 = arith.constant 0 : i32
    return %arg0, %c0_i32, %c0_i32_0 : i32, i32, i32
  }
  func.func @transform_4(%arg0: i32, %arg1: i32, %arg2: memref<1xi32, #tpu.memory_space<smem>>) -> (i32, i32, i32) {
    %c0_i32 = arith.constant 0 : i32
    %c0_i32_0 = arith.constant 0 : i32
    %c0_i32_1 = arith.constant 0 : i32
    return %arg0, %c0_i32, %c0_i32_0 : i32, i32, i32
  }
}

</mosaic_0001>

<llo_original>
// kernel: tpu_custom_call.1
$region0: #{tpu_custom_call.1}
  #allocation0 [shape = 'u32[]', space=smem, size = 0x4, offset = 0x4, fixed_abs, tag = 'smem constant byte address 0x4 - core index']
  #allocation1 [shape = 'u32[72,128]{1,0:T(1,128)}', space=vmem, size = 0x9000, scoped, tag = 'internal scratch']
  #allocation2 [shape = 'f32[1,1]{1,0:T(1,128)}', space=vmem, size = 0x200, scoped, tag = 'scratch operand']
  #allocation3 [shape = 'f32[1,1]{1,0:T(1,128)}', space=vmem, size = 0x200, scoped, tag = 'scratch operand']
  #allocation4 [shape = 's32[1]{0}', space=sflag, size = 0x4, scoped, tag = 'scoped memory for tpu_custom_call.1']
  #allocation5 [shape = 's32[1]{0:T(128)S(6)}', space=smem, size = 0x200, scoped, tag = 'prefetched SMEM operand 0']
  %s0 = inlined_call_operand.<no memory space> [shape: s32[1], index: 0, kind: input, shape index: {}]
  %s1 = inlined_call_operand.hbm [shape: f32[16,128], index: 1, kind: input, shape index: {}]
  %s2 = inlined_call_operand.hbm [shape: f32[16,128], index: 2, kind: input, shape index: {}]
  %s3 = inlined_call_operand.hbm [shape: f32[16,128], index: 3, kind: input, shape index: {}]
  %s4 = inlined_call_operand.hbm [shape: f32[1,1,1], index: 4, kind: output, shape index: {0}]
  %s5 = inlined_call_operand.hbm [shape: f32[1,1,1], index: 5, kind: output, shape index: {1}]
  %6 = xla_tuple %s4, %s5
  %s7 = sld [smem:[#allocation0]]
  $region50: #{tpu_custom_call.1} parent=0
    _
  %s9 = ssub.s32 1, %s7
  %s10 = scalar_select 0, %s9, %s7
  %11 = sst [smem:[#allocation5]] %s0
  $region1: #{tpu_custom_call.1} parent=0
    #allocation6 [shape = 'u8[8192]{0}', space=vmem, size = 0x2000, scoped, tag = 'input window, operand 1, single buffered']
    #allocation7 [shape = 's32[1]{0}', space=sflag, size = 0x4, scoped, tag = 'scoped memory for tpu_custom_call.1']
    #allocation8 [shape = 's32[1]{0}', space=sflag, size = 0x4, scoped, tag = 'scoped memory for tpu_custom_call.1']
    #allocation9 [shape = 'u8[8192]{0}', space=vmem, size = 0x2000, scoped, tag = 'input window, operand 2, single buffered']
    #allocation10 [shape = 's32[1]{0}', space=sflag, size = 0x4, scoped, tag = 'scoped memory for tpu_custom_call.1']
    #allocation11 [shape = 'u8[8192]{0}', space=vmem, size = 0x2000, scoped, tag = 'input window, operand 3, single buffered']
    #allocation12 [shape = 'u8[512]{0}', space=vmem, size = 0x400, scoped, tag = 'output window, operand 0, single buffered']
    #allocation13 [shape = 'u8[512]{0}', space=vmem, size = 0x400, scoped, tag = 'output window, operand 1, single buffered']
    #allocation14 [shape = 's32[1]{0}', space=sflag, size = 0x4, scoped, tag = 'scoped memory for tpu_custom_call.1']
    %12 = vsyncpa [#allocation7], 0
    %13 = vsyncpa [#allocation10], 0
    %14 = vsyncpa [#allocation8], 0
    %15 = vsyncpa [#allocation14], 0
    // Predicated region
    $region2: #{tpu_custom_call.1} parent=1 // pred_check
      _
    $region3: #{tpu_custom_call.1} parent=1 // pred_check_branch
      %17 = sbr.rel (0) target = $region5
    $region4: #{tpu_custom_call.1} parent=1 // pred_region
      %s18 = sadd.s32 0, 0
      %p19 = scmp.lt.s32.totalorder %s18, 0
      %s20 = scalar_select %p19, %s18, 0
      %s21 = smul.u32 2, %s20
      %23 = vsyncadd [#allocation7], 0
      %s24 = smul.addr %s21, 8
      %s25 = scalar_lea.hbm %s1, %s24
      %s26 = sshll.u32 %s25, 4
      %s27 = int_to_ptr.hbm [resolvable:$true] %s26
      %s28 = sshll.u32 [#allocation6], 4
      %s29 = int_to_ptr.vmem [resolvable:$true] %s28
      %34 = dma.hbm_to_vmem [thread:$0]  %s27, 256, %s29, [#allocation7], 128, 128, 8
    $region5: #{tpu_custom_call.1} parent=1 // pred_fallthru
      _
    // Predicated region
    $region6: #{tpu_custom_call.1} parent=1 // pred_check
      _
    $region7: #{tpu_custom_call.1} parent=1 // pred_check_branch
      %36 = sbr.rel (0) target = $region9
    $region8: #{tpu_custom_call.1} parent=1 // pred_region
      %s37 = sadd.s32 0, 0
      %p38 = scmp.lt.s32.totalorder %s37, 0
      %s39 = scalar_select %p38, %s37, 0
      %s40 = smul.u32 2, %s39
      %42 = vsyncadd [#allocation10], 0
      %s43 = smul.addr %s40, 8
      %s44 = scalar_lea.hbm %s2, %s43
      %s45 = sshll.u32 %s44, 4
      %s46 = int_to_ptr.hbm [resolvable:$true] %s45
      %s47 = sshll.u32 [#allocation9], 4
      %s48 = int_to_ptr.vmem [resolvable:$true] %s47
      %53 = dma.hbm_to_vmem [thread:$0]  %s46, 256, %s48, [#allocation10], 128, 128, 8
    $region9: #{tpu_custom_call.1} parent=1 // pred_fallthru
      _
    // Predicated region
    $region10: #{tpu_custom_call.1} parent=1 // pred_check
      _
    $region11: #{tpu_custom_call.1} parent=1 // pred_check_branch
      %55 = sbr.rel (0) target = $region13
    $region12: #{tpu_custom_call.1} parent=1 // pred_region
      %s56 = sadd.s32 0, 0
      %p57 = scmp.lt.s32.totalorder %s56, 0
      %s58 = scalar_select %p57, %s56, 0
      %s59 = smul.u32 2, %s58
      %61 = vsyncadd [#allocation10], 0
      %s62 = smul.addr %s59, 8
      %s63 = scalar_lea.hbm %s3, %s62
      %s64 = sshll.u32 %s63, 4
      %s65 = int_to_ptr.hbm [resolvable:$true] %s64
      %s66 = sshll.u32 [#allocation11], 4
      %s67 = int_to_ptr.vmem [resolvable:$true] %s66
      %72 = dma.hbm_to_vmem [thread:$0]  %s65, 256, %s67, [#allocation10], 128, 128, 8
    $region13: #{tpu_custom_call.1} parent=1 // pred_fallthru
      _
    // Predicated region
    $region14: #{tpu_custom_call.1} parent=1 // pred_check
      _
    $region15: #{tpu_custom_call.1} parent=1 // pred_check_branch
      %74 = sbr.rel (0) target = $region17
    $region16: #{tpu_custom_call.1} parent=1 // pred_region
      %76 = dma.done [#allocation7], 256
    $region17: #{tpu_custom_call.1} parent=1 // pred_fallthru
      _
    // Predicated region
    $region18: #{tpu_custom_call.1} parent=1 // pred_check
      _
    $region19: #{tpu_custom_call.1} parent=1 // pred_check_branch
      %78 = sbr.rel (0) target = $region21
    $region20: #{tpu_custom_call.1} parent=1 // pred_region
      %80 = dma.done [#allocation10], 256
    $region21: #{tpu_custom_call.1} parent=1 // pred_fallthru
      _
    // Predicated region
    $region22: #{tpu_custom_call.1} parent=1 // pred_check
      _
    $region23: #{tpu_custom_call.1} parent=1 // pred_check_branch
      %82 = sbr.rel (0) target = $region25
    $region24: #{tpu_custom_call.1} parent=1 // pred_region
      %84 = dma.done [#allocation10], 256
    $region25: #{tpu_custom_call.1} parent=1 // pred_fallthru
      _
    %s85 = sadd.s32 0, 0
    %p86 = scmp.lt.s32.totalorder %s85, 0
    %s87 = scalar_select %p86, %s85, 0
    %s88 = smul.u32 2, %s87
    %s89 = sadd.s32 0, 0
    %p90 = scmp.lt.s32.totalorder %s89, 0
    %s91 = scalar_select %p90, %s89, 0
    %s92 = smul.u32 2, %s91
    %s93 = sadd.s32 0, 0
    %p94 = scmp.lt.s32.totalorder %s93, 0
    %s95 = scalar_select %p94, %s93, 0
    %s96 = smul.u32 2, %s95
    %p97 = scmp.eq.s32.totalorder 0, 0
    // Predicated region
    $region26: #{tpu_custom_call.1} parent=1 // pred_check
      %p98 = pneg %p97
    $region27: #{tpu_custom_call.1} parent=1 // pred_check_branch
      %100 = sbr.rel (%p98) target = $region29
    $region28: #{tpu_custom_call.1} parent=1 // pred_region
      %vm101 = vcmask 0
      %102 = vst.msk [vmem:[#allocation2] sm:$0x1] %vm101, 0.0
      %103 = vst.msk [vmem:[#allocation3] sm:$0x1] %vm101, 0.0
    $region29: #{tpu_custom_call.1} parent=1 // pred_fallthru
      _
    %v104 = vld [vmem:[#allocation6] sm:$0xff]
    %v105 = vld [vmem:[#allocation6 + $0x8] sm:$0xff]
    %v106 = vld [vmem:[#allocation9] sm:$0xff]
    %v107 = vld [vmem:[#allocation9 + $0x8] sm:$0xff]
    %v108 = vld [vmem:[#allocation11] sm:$0xff]
    %v109 = vld [vmem:[#allocation11 + $0x8] sm:$0xff]
    %v110 = vand.u32 2147483647, %v104
    %v111 = vand.u32 2147483647, %v105
    %v112 = vsub.f32 0.0, %v110
    %v113 = vsub.f32 0.0, %v111
    %v114 = vmul.f32 %v112, 1.442695
    %v115 = vpow.pop %v114
    %v116 = vmul.f32 %v113, 1.442695
    %v117 = vpow.pop %v116
    %v118 = vadd.f32 %v115, 1.0
    %v119 = vlog2.pop %v118
    %v120 = vmul.f32 %v119, 0.6931472
    %v121 = vmul.f32 -0.5, %v115
    %v122 = vadd.f32 %v121, 1.0
    %v123 = vmul.f32 %v122, %v115
    %v124 = vand.u32 2147483647, %v115
    %vm125 = vcmp.lt.f32.partialorder %v124, 0.0004427343
    %v126 = vsel %vm125, %v123, %v120
    %v127 = vadd.f32 %v117, 1.0
    %v128 = vlog2.pop %v127
    %v129 = vmul.f32 %v128, 0.6931472
    %v130 = vmul.f32 -0.5, %v117
    %v131 = vadd.f32 %v130, 1.0
    %v132 = vmul.f32 %v131, %v117
    %v133 = vand.u32 2147483647, %v117
    %vm134 = vcmp.lt.f32.partialorder %v133, 0.0004427343
    %v135 = vsel %vm134, %v132, %v129
    %v136 = vmin.f32 %v104, 0.0
    %v137 = vmin.f32 %v105, 0.0
    %v138 = vsub.f32 %v136, %v126
    %v139 = vsub.f32 %v137, %v135
    %v140 = vsub.f32 0.0, %v104
    %v141 = vsub.f32 0.0, %v105
    %v142 = vmin.f32 %v140, 0.0
    %v143 = vmin.f32 %v141, 0.0
    %v144 = vsub.f32 %v142, %v126
    %v145 = vsub.f32 %v143, %v135
    %v146 = vadd.f32 %v115, 1.0
    %v147 = vadd.f32 %v117, 1.0
    %v148 = vrcp.pop %v146
    %v149 = vmul.f32 %v146, %v148
    %v150 = vsub.f32 1.0, %v149
    %v151 = vmul.f32 %v148, %v150
    %v152 = vadd.f32 %v148, %v151
    %vm153 = vweird.f32 %v146
    %vm154 = vweird.f32 %v148
    %vm155 = vmor %vm153, %vm154
    %v156 = vsel %vm155, %v148, %v152
    %v157 = vand.u32 2147483647, %v146
    %vm158 = vcmp.eq.f32.partialorder %v157, 8.507059e+37
    %v159 = vand.u32 %v146, 2147483648
    %v160 = vor.u32 1.1754944e-38, %v159
    %v161 = vsel %vm158, %v160, %v156
    %v162 = vmul.f32 1.0, %v161
    %v163 = vrcp.pop %v147
    %v164 = vmul.f32 %v147, %v163
    %v165 = vsub.f32 1.0, %v164
    %v166 = vmul.f32 %v163, %v165
    %v167 = vadd.f32 %v163, %v166
    %vm168 = vweird.f32 %v147
    %vm169 = vweird.f32 %v163
    %vm170 = vmor %vm168, %vm169
    %v171 = vsel %vm170, %v163, %v167
    %v172 = vand.u32 2147483647, %v147
    %vm173 = vcmp.eq.f32.partialorder %v172, 8.507059e+37
    %v174 = vand.u32 %v147, 2147483648
    %v175 = vor.u32 1.1754944e-38, %v174
    %v176 = vsel %vm173, %v175, %v171
    %v177 = vmul.f32 1.0, %v176
    %v178 = vmul.f32 %v115, %v162
    %v179 = vmul.f32 %v117, %v177
    %vm180 = vcmp.ge.f32.partialorder %v104, 0.0
    %vm181 = vcmp.ge.f32.partialorder %v105, 0.0
    %v182 = vsel %vm180, %v162, %v178
    %v183 = vsel %vm181, %v177, %v179
    %v184 = vsel %vm180, %v178, %v162
    %v185 = vsel %vm181, %v179, %v177
    %vm186 = vcmp.eq.f32.partialorder %v106, 1.0
    %vm187 = vcmp.eq.f32.partialorder %v107, 1.0
    %v188 = vsel %vm186, %v108, 0.0
    %v189 = vsel %vm187, %v109, 0.0
    %vm190 = vcmp.lt.f32.partialorder %v106, 1.0
    %vm191 = vcmp.lt.f32.partialorder %v107, 1.0
    %v192 = vsel %vm190, %v108, 0.0
    %v193 = vsel %vm191, %v109, 0.0
    %v194 = vsub.f32 1.0, %v106
    %v195 = vsub.f32 1.0, %v107
    %v196 = vmul.f32 %v194, %v194
    %v197 = vmul.f32 %v195, %v195
    %v198 = vmul.f32 %v196, %v196
    %v199 = vmul.f32 %v197, %v197
    %v200 = vmul.f32 %v138, %v184
    %v201 = vmul.f32 %v139, %v185
    %v202 = vmul.f32 %v200, %v184
    %v203 = vmul.f32 %v201, %v185
    %v204 = vmul.f32 %v202, %v188
    %v205 = vmul.f32 %v203, %v189
    %v206 = vmul.f32 %v144, %v182
    %v207 = vmul.f32 %v145, %v183
    %v208 = vmul.f32 %v206, %v182
    %v209 = vmul.f32 %v207, %v183
    %v210 = vmul.f32 %v208, %v198
    %v211 = vmul.f32 %v209, %v199
    %v212 = vmul.f32 %v210, %v192
    %v213 = vmul.f32 %v211, %v193
    %v214 = vadd.f32 %v204, %v212
    %v215 = vadd.f32 %v205, %v213
    %s216 = sadd.s32 0, 0
    %s217 = smul.u32 %s216, 16
    %v218 = vlaneseq
    %v219 = vshrl.u32 %v218, 7
    %v220 = vadd.s32 %v219, 8
    %v221 = vstv %s217
    %v222 = vadd.s32 %v219, %v221
    %v223 = vadd.s32 %v220, %v221
    %v224 = vlaneseq
    %v225 = vand.u32 %v224, 127
    %v226 = vmul.u32 %v222, 128
    %v227 = vmul.u32 %v223, 128
    %v228 = vadd.s32 %v226, %v225
    %v229 = vadd.s32 %v227, %v225
    %s230 = sld [smem:[#allocation5]]
    %v231 = vstv %s230
    %vm232 = vcmp.lt.s32.totalorder %v228, %v231
    %vm233 = vcmp.lt.s32.totalorder %v229, %v231
    %v234 = vsel %vm232, %v214, 0.0
    %v235 = vsel %vm233, %v215, 0.0
    %v236 = vsel %vm232, %v188, 0.0
    %v237 = vsel %vm233, %v189, 0.0
    %v238 = vld [vmem:[#allocation2] sm:$0x1]
    %v239 = vadd.f32 %v234, %v235
    %240 = vadd.xlane.f32.xlu0 %v239
    %v241 = vpop.xlane.xlu0 %240
    %v242 = vrot.slane %v241, 4
    %v243 = vadd.f32 %v241, %v242
    %v244 = vrot.slane %v243, 2
    %v245 = vadd.f32 %v243, %v244
    %v246 = vrot.slane %v245, 1
    %v247 = vadd.f32 %v245, %v246
    %s248 = vtos %v247
    %v249 = vstv %s248
    %v250 = vadd.f32 %v238, %v249
    %vm251 = vcmask 0
    %252 = vst.msk [vmem:[#allocation2] sm:$0x1] %vm251, %v250
    %v253 = vld [vmem:[#allocation3] sm:$0x1]
    %v254 = vadd.f32 %v236, %v237
    %255 = vadd.xlane.f32.xlu0 %v254
    %v256 = vpop.xlane.xlu0 %255
    %v257 = vrot.slane %v256, 4
    %v258 = vadd.f32 %v256, %v257
    %v259 = vrot.slane %v258, 2
    %v260 = vadd.f32 %v258, %v259
    %v261 = vrot.slane %v260, 1
    %v262 = vadd.f32 %v260, %v261
    %s263 = vtos %v262
    %v264 = vstv %s263
    %v265 = vadd.f32 %v253, %v264
    %266 = vst.msk [vmem:[#allocation3] sm:$0x1] %vm251, %v265
    // Predicated region
    $region30: #{tpu_custom_call.1} parent=1 // pred_check
      %p267 = pneg %p97
    $region31: #{tpu_custom_call.1} parent=1 // pred_check_branch
      %269 = sbr.rel (%p267) target = $region33
    $region32: #{tpu_custom_call.1} parent=1 // pred_region
      %v270 = vld [vmem:[#allocation2] sm:$0x1]
      %271 = vst.msk [vmem:[#allocation12] sm:$0x1] %vm251, %v270
      %v272 = vld [vmem:[#allocation3] sm:$0x1]
      %273 = vst.msk [vmem:[#allocation13] sm:$0x1] %vm251, %v272
    $region33: #{tpu_custom_call.1} parent=1 // pred_fallthru
      _
    // Predicated region
    $region34: #{tpu_custom_call.1} parent=1 // pred_check
      _
    $region35: #{tpu_custom_call.1} parent=1 // pred_check_branch
      %275 = sbr.rel (0) target = $region37
    $region36: #{tpu_custom_call.1} parent=1 // pred_region
      %277 = vsyncadd [#allocation8], 0
      %s279 = sshll.u32 [#allocation12], 4
      %s280 = int_to_ptr.vmem [resolvable:$true] %s279
      %s281 = sshll.u32 %s4, 4
      %s282 = int_to_ptr.hbm [resolvable:$true] %s281
      %284 = dma.vmem_to_hbm [thread:$0]  %s280, 16, %s282, [#allocation8]
    $region37: #{tpu_custom_call.1} parent=1 // pred_fallthru
      _
    // Predicated region
    $region38: #{tpu_custom_call.1} parent=1 // pred_check
      _
    $region39: #{tpu_custom_call.1} parent=1 // pred_check_branch
      %286 = sbr.rel (0) target = $region41
    $region40: #{tpu_custom_call.1} parent=1 // pred_region
      %288 = vsyncadd [#allocation14], 0
      %s290 = sshll.u32 [#allocation13], 4
      %s291 = int_to_ptr.vmem [resolvable:$true] %s290
      %s292 = sshll.u32 %s5, 4
      %s293 = int_to_ptr.hbm [resolvable:$true] %s292
      %295 = dma.vmem_to_hbm [thread:$0]  %s291, 16, %s293, [#allocation14]
    $region41: #{tpu_custom_call.1} parent=1 // pred_fallthru
      _
    // Predicated region
    $region42: #{tpu_custom_call.1} parent=1 // pred_check
      _
    $region43: #{tpu_custom_call.1} parent=1 // pred_check_branch
      %297 = sbr.rel (0) target = $region45
    $region44: #{tpu_custom_call.1} parent=1 // pred_region
      %299 = dma.done [#allocation8], 16
    $region45: #{tpu_custom_call.1} parent=1 // pred_fallthru
      _
    // Predicated region
    $region46: #{tpu_custom_call.1} parent=1 // pred_check
      _
    $region47: #{tpu_custom_call.1} parent=1 // pred_check_branch
      %301 = sbr.rel (0) target = $region49
    $region48: #{tpu_custom_call.1} parent=1 // pred_region
      %303 = dma.done [#allocation14], 16
    $region49: #{tpu_custom_call.1} parent=1 // pred_fallthru
      _
    %304 = vsyncpa [#allocation7], 1
    %305 = vsyncpa [#allocation10], 1
    %306 = vsyncpa [#allocation8], 1
    %307 = vsyncpa [#allocation14], 1

</llo_original>
